<compile_context>
chip_gen: v7x
topology: tpu7x:2x2x1
jax: 0.10.0
libtpu: 0.0.40
codegen_flags: <defaults>
</compile_context>

<pallas_src>
import functools

import jax
import jax.numpy as jnp
from jax import lax
from jax.experimental import pallas as pl
from jax.experimental.pallas import tpu as pltpu


def _uniface_loss_kernel(logits_ref, labels_ref, out_ref, acc_ref, *,
                         scale, margin, batch_size):
    i = pl.program_id(0)
    n_tiles = pl.num_programs(0)

    @pl.when(i == 0)
    def _():
        acc_ref[...] = jnp.zeros_like(acc_ref)

    x = logits_ref[...].astype(jnp.float32)        # [TB, C]
    labels = labels_ref[...]                       # [TB, 1] int32
    tb, c = x.shape

    # Mask rows past the true batch size on the tail tile.
    row_ids = i * tb + lax.broadcasted_iota(jnp.int32, (tb, 1), 0)
    row_ok = row_ids < batch_size                  # [TB, 1] bool
    x = jnp.where(row_ok, x, 0.0)

    # Row L2 normalisation via rsqrt (EUP); 1e-24 on sum-of-squares
    # == clamping the norm at 1e-12 as F.normalize does.
    sum_sq = jnp.sum(x * x, axis=1, keepdims=True)            # [TB, 1]
    inv_norm = lax.rsqrt(jnp.maximum(sum_sq, 1e-24))
    z0 = (scale * inv_norm) * x                    # scale * cosine, [TB, C]

    # Target logit per row (no full one-hot / margin subtraction over [TB, C]).
    col = lax.broadcasted_iota(jnp.int32, (tb, c), 1)
    is_tgt = col == labels
    t = jnp.sum(jnp.where(is_tgt, z0, 0.0), axis=1, keepdims=True)  # [TB, 1]
    tm = t - scale * margin                        # margin-corrected target

    # Log-sum-exp with the margin applied only to the target term:
    #   lse = m + log( sum_j exp(z0_j - m) - exp(t - m) + exp(tm - m) )
    # m = max(z0) still upper-bounds every logit since the margin only lowers
    # the target entry, so this is a valid stabilizer.
    m = jnp.max(z0, axis=1, keepdims=True)
    s0 = jnp.sum(jnp.exp(z0 - m), axis=1, keepdims=True)
    s = s0 - jnp.exp(t - m) + jnp.exp(tm - m)
    per_row = m + jnp.log(s) - tm                  # [TB, 1] CE per sample

    per_row = jnp.where(row_ok, per_row, 0.0)
    acc_ref[...] += jnp.sum(per_row, keepdims=True)

    @pl.when(i == n_tiles - 1)
    def _():
        out_ref[...] = acc_ref[...] * jnp.float32(1.0 / batch_size)


def _round_up(x, m):
    return ((x + m - 1) // m) * m


def _default_tile_b(batch, n_classes, vmem_budget_bytes=8 << 20):
    """Batch tile: multiple of 8, double-buffered f32 logits tile fits budget."""
    rows = max(8, vmem_budget_bytes // (2 * 4 * max(n_classes, 1)))
    rows = max(8, (rows // 8) * 8)
    rows = min(rows, 512)                      # cap per-step tile size
    rows = min(rows, _round_up(batch, 8))      # no bigger than needed
    return rows


def uniface_loss(logits, labels, *, scale=64.0, margin=0.5, tile_b=None):
    """Pallas TPU implementation of UniFaceLoss.forward(logits, labels)."""
    b, c = logits.shape
    labels_2d = labels.astype(jnp.int32).reshape(b, 1)

    tb = _default_tile_b(b, c) if tile_b is None else int(tile_b)
    assert tb % 8 == 0, "batch tile must be a multiple of 8"
    n_tiles = pl.cdiv(b, tb)

    kernel = functools.partial(_uniface_loss_kernel,
                               scale=float(scale),
                               margin=float(margin),
                               batch_size=b)

    out = pl.pallas_call(
        kernel,
        out_shape=jax.ShapeDtypeStruct((1, 1), jnp.float32),
        grid=(n_tiles,),
        in_specs=[
            pl.BlockSpec((tb, c), lambda i: (i, 0)),   # logits tile
            pl.BlockSpec((tb, 1), lambda i: (i, 0)),   # labels column
        ],
        out_specs=pl.BlockSpec((1, 1), lambda i: (0, 0)),
        scratch_shapes=[pltpu.VMEM((1, 1), jnp.float32)],
        compiler_params=pltpu.CompilerParams(
            dimension_semantics=("arbitrary",)),       # running accumulator
    )(logits, labels_2d)
    return out[0, 0]


def _reference(logits, labels, *, scale=64.0, margin=0.5):
    """Pure-JAX reference mirroring the PyTorch UniFaceLoss module."""
    x = logits.astype(jnp.float32)
    b, c = x.shape
    norm = jnp.sqrt(jnp.sum(x * x, axis=1, keepdims=True))
    cosine = x / jnp.maximum(norm, 1e-12)
    one_hot = jax.nn.one_hot(labels, c, dtype=jnp.float32)
    z = scale * (cosine - one_hot * margin)
    lse = jax.nn.logsumexp(z, axis=1)
    tgt = jnp.take_along_axis(z, labels[:, None], axis=1)[:, 0]
    return jnp.mean(lse - tgt)


if __name__ == "__main__":
    key = jax.random.PRNGKey(0)
    k1, k2, k3, k4 = jax.random.split(key, 4)

    # Case 1: aligned shapes (B multiple of 8, C multiple of 128).
    b1, c1 = 16, 256
    logits1 = jax.random.normal(k1, (b1, c1), dtype=jnp.float32)
    labels1 = jax.random.randint(k2, (b1,), 0, c1, dtype=jnp.int32)
    out1 = jax.block_until_ready(uniface_loss(logits1, labels1))
    ref1 = _reference(logits1, labels1)
    assert jnp.allclose(out1, ref1, rtol=1e-4, atol=1e-4), (out1, ref1)

    # Case 2: ragged batch (B not a multiple of the tile) -> exercises
    # multi-step grid, accumulator carry, and tail-row masking.
    b2, c2 = 20, 384
    logits2 = jax.random.normal(k3, (b2, c2), dtype=jnp.float32)
    labels2 = jax.random.randint(k4, (b2,), 0, c2, dtype=jnp.int32)
    out2 = jax.block_until_ready(uniface_loss(logits2, labels2, tile_b=8))
    ref2 = _reference(logits2, labels2)
    assert jnp.allclose(out2, ref2, rtol=1e-4, atol=1e-4), (out2, ref2)

    print("KERNEL_OK")
</pallas_src>

<mosaic_0001>
module attributes {stable_mosaic.version = 11 : i64} {
  func.func @_uniface_loss_kernel(%arg0: i32, %arg1: memref<16x256xf32, #tpu.memory_space<vmem>>, %arg2: memref<16x1xi32, #tpu.memory_space<vmem>>, %arg3: memref<1x1xf32, #tpu.memory_space<vmem>>, %arg4: memref<1x1xf32, #tpu.memory_space<vmem>>) attributes {dimension_semantics = [#tpu.dimension_semantics<arbitrary>], iteration_bounds = array<i64: 1>, scalar_prefetch = 0 : i64, scratch_operands = 1 : i64, tpu.core_type = #tpu.core_type<tc>, window_params = [{transform_indices = @transform_0, window_bounds = array<i64: 16, 256>}, {transform_indices = @transform_1, window_bounds = array<i64: 16, 1>}, {pipeline_mode = #tpu.pipeline_mode<synchronous>, transform_indices = @transform_2, window_bounds = array<i64: 1, 1>}]} {
    %c0_i32 = arith.constant 0 : i32
    %0 = arith.cmpi eq, %arg0, %c0_i32 : i32
    %1 = arith.extui %0 : i1 to i32
    %c0_i32_0 = arith.constant 0 : i32
    %2 = arith.cmpi ne, %1, %c0_i32_0 : i32
    scf.if %2 {
      %cst_21 = arith.constant 0.000000e+00 : f32
      %63 = vector.broadcast %cst_21 : f32 to vector<1x1xf32>
      %c0_22 = arith.constant 0 : index
      %c0_23 = arith.constant 0 : index
      %64 = vector.load %arg4[%c0_22, %c0_23] : memref<1x1xf32, #tpu.memory_space<vmem>>, vector<1x1xf32>
      tpu.vector_store %arg4[%c0_22, %c0_23], %63 {strides = array<i32>} : memref<1x1xf32, #tpu.memory_space<vmem>>, vector<1x1xf32>,
    } else {
    }
    %c0 = arith.constant 0 : index
    %c0_1 = arith.constant 0 : index
    %3 = vector.load %arg1[%c0, %c0_1] : memref<16x256xf32, #tpu.memory_space<vmem>>, vector<16x256xf32>
    %c0_2 = arith.constant 0 : index
    %c0_3 = arith.constant 0 : index
    %4 = vector.load %arg2[%c0_2, %c0_3] : memref<16x1xi32, #tpu.memory_space<vmem>>, vector<16x1xi32>
    %c16_i32 = arith.constant 16 : i32
    %5 = arith.muli %arg0, %c16_i32 : i32
    %6 = tpu.iota {dimensions = array<i32: 0>} : vector<16x1xi32>
    %7 = vector.broadcast %5 : i32 to vector<16x1xi32>
    %8 = arith.addi %7, %6 : vector<16x1xi32>
    %c16_i32_4 = arith.constant 16 : i32
    %9 = vector.broadcast %c16_i32_4 : i32 to vector<16x1xi32>
    %10 = arith.cmpi slt, %8, %9 : vector<16x1xi32>
    %cst = arith.constant 0.000000e+00 : f32
    %11 = vector.shape_cast %10 : vector<16x1xi1> to vector<16x1xi1>
    %12 = vector.broadcast %11 : vector<16x1xi1> to vector<16x256xi1>
    %13 = vector.broadcast %cst : f32 to vector<16x256xf32>
    %14 = arith.select %12, %3, %13 : vector<16x256xi1>, vector<16x256xf32>
    %15 = arith.mulf %14, %14 : vector<16x256xf32>
    %cst_5 = arith.constant dense<0.000000e+00> : vector<16xf32>
    %16 = vector.multi_reduction <add>, %15, %cst_5 [1] : vector<16x256xf32> to vector<16xf32>
    %17 = vector.shape_cast %16 : vector<16xf32> to vector<16x1xf32>
    %cst_6 = arith.constant 1.000000e-24 : f32
    %18 = vector.broadcast %cst_6 : f32 to vector<16x1xf32>
    %19 = arith.maximumf %17, %18 : vector<16x1xf32>
    %20 = math.rsqrt %19 : vector<16x1xf32>
    %cst_7 = arith.constant 6.400000e+01 : f32
    %21 = vector.broadcast %cst_7 : f32 to vector<16x1xf32>
    %22 = arith.mulf %21, %20 : vector<16x1xf32>
    %23 = vector.broadcast %22 : vector<16x1xf32> to vector<16x256xf32>
    %24 = arith.mulf %23, %14 : vector<16x256xf32>
    %25 = tpu.iota {dimensions = array<i32: 1>} : vector<16x256xi32>
    %26 = vector.broadcast %4 : vector<16x1xi32> to vector<16x256xi32>
    %27 = arith.cmpi eq, %25, %26 : vector<16x256xi32>
    %cst_8 = arith.constant 0.000000e+00 : f32
    %28 = vector.broadcast %cst_8 : f32 to vector<16x256xf32>
    %29 = arith.select %27, %24, %28 : vector<16x256xi1>, vector<16x256xf32>
    %cst_9 = arith.constant dense<0.000000e+00> : vector<16xf32>
    %30 = vector.multi_reduction <add>, %29, %cst_9 [1] : vector<16x256xf32> to vector<16xf32>
    %31 = vector.shape_cast %30 : vector<16xf32> to vector<16x1xf32>
    %cst_10 = arith.constant 3.200000e+01 : f32
    %32 = vector.broadcast %cst_10 : f32 to vector<16x1xf32>
    %33 = arith.subf %31, %32 : vector<16x1xf32>
    %cst_11 = arith.constant dense<0xFF800000> : vector<16xf32>
    %34 = vector.multi_reduction <maximumf>, %24, %cst_11 [1] : vector<16x256xf32> to vector<16xf32>
    %35 = vector.shape_cast %34 : vector<16xf32> to vector<16x1xf32>
    %36 = vector.broadcast %35 : vector<16x1xf32> to vector<16x256xf32>
    %37 = arith.subf %24, %36 : vector<16x256xf32>
    %38 = math.exp %37 : vector<16x256xf32>
    %cst_12 = arith.constant dense<0.000000e+00> : vector<16xf32>
    %39 = vector.multi_reduction <add>, %38, %cst_12 [1] : vector<16x256xf32> to vector<16xf32>
    %40 = vector.shape_cast %39 : vector<16xf32> to vector<16x1xf32>
    %41 = arith.subf %31, %35 : vector<16x1xf32>
    %42 = math.exp %41 : vector<16x1xf32>
    %43 = arith.subf %40, %42 : vector<16x1xf32>
    %44 = arith.subf %33, %35 : vector<16x1xf32>
    %45 = math.exp %44 : vector<16x1xf32>
    %46 = arith.addf %43, %45 : vector<16x1xf32>
    %47 = math.log %46 : vector<16x1xf32>
    %48 = arith.addf %35, %47 : vector<16x1xf32>
    %49 = arith.subf %48, %33 : vector<16x1xf32>
    %cst_13 = arith.constant 0.000000e+00 : f32
    %50 = vector.broadcast %cst_13 : f32 to vector<16x1xf32>
    %51 = arith.select %10, %49, %50 : vector<16x1xi1>, vector<16x1xf32>
    %c0_14 = arith.constant 0 : index
    %c0_15 = arith.constant 0 : index
    %52 = vector.load %arg4[%c0_14, %c0_15] : memref<1x1xf32, #tpu.memory_space<vmem>>, vector<1x1xf32>
    %53 = vector.shape_cast %51 : vector<16x1xf32> to vector<1x16x1xf32>
    %cst_16 = arith.constant dense<0.000000e+00> : vector<1xf32>
    %54 = vector.multi_reduction <add>, %53, %cst_16 [1, 2] : vector<1x16x1xf32> to vector<1xf32>
    %55 = vector.shape_cast %54 : vector<1xf32> to vector<1x1x1xf32>
    %56 = vector.extract %55[0, 0, 0] : f32 from vector<1x1x1xf32>
    %57 = vector.broadcast %56 : f32 to vector<1x1xf32>
    %58 = arith.addf %52, %57 : vector<1x1xf32>
    %c0_17 = arith.constant 0 : index
    %c0_18 = arith.constant 0 : index
    %59 = vector.load %arg4[%c0_17, %c0_18] : memref<1x1xf32, #tpu.memory_space<vmem>>, vector<1x1xf32>
    tpu.vector_store %arg4[%c0_17, %c0_18], %58 {strides = array<i32>} : memref<1x1xf32, #tpu.memory_space<vmem>>, vector<1x1xf32>,
    %c0_i32_19 = arith.constant 0 : i32
    %60 = arith.cmpi eq, %arg0, %c0_i32_19 : i32
    %61 = arith.extui %60 : i1 to i32
    %c0_i32_20 = arith.constant 0 : i32
    %62 = arith.cmpi ne, %61, %c0_i32_20 : i32
    scf.if %62 {
      %c0_21 = arith.constant 0 : index
      %c0_22 = arith.constant 0 : index
      %63 = vector.load %arg4[%c0_21, %c0_22] : memref<1x1xf32, #tpu.memory_space<vmem>>, vector<1x1xf32>
      %cst_23 = arith.constant 6.250000e-02 : f32
      %64 = vector.broadcast %cst_23 : f32 to vector<1x1xf32>
      %65 = arith.mulf %63, %64 : vector<1x1xf32>
      %c0_24 = arith.constant 0 : index
      %c0_25 = arith.constant 0 : index
      %66 = vector.load %arg3[%c0_24, %c0_25] : memref<1x1xf32, #tpu.memory_space<vmem>>, vector<1x1xf32>
      tpu.vector_store %arg3[%c0_24, %c0_25], %65 {strides = array<i32>} : memref<1x1xf32, #tpu.memory_space<vmem>>, vector<1x1xf32>,
    } else {
    }
    return
  }
  func.func @transform_0(%arg0: i32) -> (i32, i32) {
    %c0_i32 = arith.constant 0 : i32
    %c0_i32_0 = arith.constant 0 : i32
    return %arg0, %c0_i32 : i32, i32
  }
  func.func @transform_1(%arg0: i32) -> (i32, i32) {
    %c0_i32 = arith.constant 0 : i32
    %c0_i32_0 = arith.constant 0 : i32
    return %arg0, %c0_i32 : i32, i32
  }
  func.func @transform_2(%arg0: i32) -> (i32, i32) {
    %c0_i32 = arith.constant 0 : i32
    %c0_i32_0 = arith.constant 0 : i32
    %c0_i32_1 = arith.constant 0 : i32
    return %c0_i32, %c0_i32_0 : i32, i32
  }
}

</mosaic_0001>

<llo_original>
// kernel: tpu_custom_call.1
$region0: #{tpu_custom_call.1}
  #allocation0 [shape = 'u32[]', space=smem, size = 0x4, offset = 0x4, fixed_abs, tag = 'smem constant byte address 0x4 - core index']
  #allocation1 [shape = 'u32[144,128]{1,0:T(1,128)}', space=vmem, size = 0x12000, scoped, tag = 'internal scratch']
  #allocation2 [shape = 'f32[1,1]{1,0:T(1,128)}', space=vmem, size = 0x200, scoped, tag = 'scratch operand']
  %s0 = inlined_call_operand.hbm [shape: f32[16,256], index: 0, kind: input, shape index: {}]
  %s1 = inlined_call_operand.vmem [shape: s32[16,1], index: 1, kind: input, shape index: {}]
  %s2 = inlined_call_operand.hbm [shape: f32[1,1], index: 2, kind: output, shape index: {}]
  %s3 = sld [smem:[#allocation0]]
  $region30: #{tpu_custom_call.1} parent=0
    _
  %s5 = ssub.s32 1, %s3
  %s6 = scalar_select 0, %s5, %s3
  $region1: #{tpu_custom_call.1} parent=0
    #allocation3 [shape = 'u8[16384]{0}', space=vmem, size = 0x4000, scoped, tag = 'input window, operand 0, single buffered']
    #allocation4 [shape = 's32[1]{0}', space=sflag, size = 0x4, scoped, tag = 'scoped memory for tpu_custom_call.1']
    #allocation5 [shape = 's32[1]{0}', space=sflag, size = 0x4, scoped, tag = 'scoped memory for tpu_custom_call.1']
    #allocation6 [shape = 'u8[512]{0}', space=vmem, size = 0x400, scoped, tag = 'output window, operand 0, single buffered']
    %7 = vsyncpa [#allocation4], 0
    %8 = vsyncpa [#allocation5], 0
    // Predicated region
    $region2: #{tpu_custom_call.1} parent=1 // pred_check
      _
    $region3: #{tpu_custom_call.1} parent=1 // pred_check_branch
      %10 = sbr.rel (0) target = $region5
    $region4: #{tpu_custom_call.1} parent=1 // pred_region
      %s12 = ssub.s32 512, 512
      %13 = vsyncadd [#allocation4], %s12
      %s14 = sshll.u32 [#allocation3], 4
      %s15 = int_to_ptr.vmem [resolvable:$true] %s14
      %20 = dma.hbm_to_vmem [thread:$0]  %s0, 512, %s15, [#allocation4], 256, 256, 16
    $region5: #{tpu_custom_call.1} parent=1 // pred_fallthru
      _
    // Predicated region
    $region6: #{tpu_custom_call.1} parent=1 // pred_check
      _
    $region7: #{tpu_custom_call.1} parent=1 // pred_check_branch
      %22 = sbr.rel (0) target = $region9
    $region8: #{tpu_custom_call.1} parent=1 // pred_region
      _
    $region9: #{tpu_custom_call.1} parent=1 // pred_fallthru
      _
    // Predicated region
    $region10: #{tpu_custom_call.1} parent=1 // pred_check
      _
    $region11: #{tpu_custom_call.1} parent=1 // pred_check_branch
      %24 = sbr.rel (0) target = $region13
    $region12: #{tpu_custom_call.1} parent=1 // pred_region
      %25 = dma.done [#allocation4], 512
    $region13: #{tpu_custom_call.1} parent=1 // pred_fallthru
      _
    %p26 = scmp.eq.s32.totalorder 0, 0
    // Predicated region
    $region14: #{tpu_custom_call.1} parent=1 // pred_check
      %p27 = pneg %p26
    $region15: #{tpu_custom_call.1} parent=1 // pred_check_branch
      %29 = sbr.rel (%p27) target = $region17
    $region16: #{tpu_custom_call.1} parent=1 // pred_region
      %vm30 = vcmask 0
      %31 = vst.msk [vmem:[#allocation2] sm:$0x1] %vm30, 0.0
    $region17: #{tpu_custom_call.1} parent=1 // pred_fallthru
      _
    %v32 = vld [vmem:[#allocation3] sm:$0xff]
    %v33 = vld [vmem:[#allocation3 + $0x8] sm:$0xff]
    %v34 = vld [vmem:[#allocation3 + $0x10] sm:$0xff]
    %v35 = vld [vmem:[#allocation3 + $0x18] sm:$0xff]
    %v36 = vld [vmem:[%s1] sm:$0xff]
    %v37 = vld [vmem:[%s1 + $0x8] sm:$0xff]
    %s38 = smul.u32 0, 16
    %v39 = vlaneseq
    %v40 = vshrl.u32 %v39, 7
    %v41 = vadd.s32 %v40, 8
    %v42 = vstv %s38
    %v43 = vadd.s32 %v42, %v40
    %v44 = vadd.s32 %v42, %v41
    %vm45 = vcmp.lt.s32.totalorder %v43, 16
    %vm46 = vcmp.lt.s32.totalorder %v44, 16
    %v47 = vsel %vm45, 1, 0
    %v48 = vsel %vm46, 1, 0
    %vm49 = vcmp.eq.s32.totalorder %v47, 1
    %vm50 = vcmp.eq.s32.totalorder %v48, 1
    %v51 = vsel %vm49, %v32, 0.0
    %v52 = vsel %vm49, %v33, 0.0
    %v53 = vsel %vm50, %v34, 0.0
    %v54 = vsel %vm50, %v35, 0.0
    %v55 = vmul.f32 %v51, %v51
    %v56 = vmul.f32 %v52, %v52
    %v57 = vmul.f32 %v53, %v53
    %v58 = vmul.f32 %v54, %v54
    %v59 = vadd.f32 %v55, %v56
    %60 = vadd.xlane.f32.xlu0 %v59
    %v61 = vpop.xlane.xlu0 %60
    %v62 = vadd.f32 %v57, %v58
    %63 = vadd.xlane.f32.xlu0 %v62
    %v64 = vpop.xlane.xlu0 %63
    %v65 = vmax.f32 %v61, 1e-24
    %v66 = vmax.f32 %v64, 1e-24
    %v67 = vrsqrt.pop %v65
    %v68 = vrsqrt.pop %v66
    %v69 = vmul.f32 %v67, 64.0
    %v70 = vmul.f32 %v68, 64.0
    %v71 = vmul.f32 %v69, %v51
    %v72 = vmul.f32 %v69, %v52
    %v73 = vmul.f32 %v70, %v53
    %v74 = vmul.f32 %v70, %v54
    %v75 = vlaneseq
    %v76 = vand.u32 %v75, 127
    %v77 = vadd.s32 %v76, 128
    %78 = vset.pattern.permute.xlu0 0
    %79 = vperm.xlu0 %78, %v36
    %v80 = vpop.permute.xlu0 %79
    %81 = vset.pattern.permute.xlu0 0
    %82 = vperm.xlu0 %81, %v37
    %v83 = vpop.permute.xlu0 %82
    %vm84 = vcmp.eq.s32.totalorder %v76, %v80
    %vm85 = vcmp.eq.s32.totalorder %v77, %v80
    %vm86 = vcmp.eq.s32.totalorder %v76, %v83
    %vm87 = vcmp.eq.s32.totalorder %v77, %v83
    %v88 = vsel %vm84, %v71, 0.0
    %v89 = vsel %vm85, %v72, 0.0
    %v90 = vsel %vm86, %v73, 0.0
    %v91 = vsel %vm87, %v74, 0.0
    %v92 = vadd.f32 %v88, %v89
    %93 = vadd.xlane.f32.xlu0 %v92
    %v94 = vpop.xlane.xlu0 %93
    %v95 = vadd.f32 %v90, %v91
    %96 = vadd.xlane.f32.xlu0 %v95
    %v97 = vpop.xlane.xlu0 %96
    %v98 = vsub.f32 %v94, 32.0
    %v99 = vsub.f32 %v97, 32.0
    %v100 = vmax.f32 %v71, %v72
    %101 = vmax.xlane.f32.xlu0 %v100
    %v102 = vpop.xlane.xlu0 %101
    %v103 = vmax.f32 %v73, %v74
    %104 = vmax.xlane.f32.xlu0 %v103
    %v105 = vpop.xlane.xlu0 %104
    %v106 = vsub.f32 %v71, %v102
    %v107 = vsub.f32 %v72, %v102
    %v108 = vsub.f32 %v73, %v105
    %v109 = vsub.f32 %v74, %v105
    %v110 = vmul.f32 %v106, 1.442695
    %v111 = vpow.pop %v110
    %v112 = vmul.f32 %v107, 1.442695
    %v113 = vpow.pop %v112
    %v114 = vmul.f32 %v108, 1.442695
    %v115 = vpow.pop %v114
    %v116 = vmul.f32 %v109, 1.442695
    %v117 = vpow.pop %v116
    %v118 = vadd.f32 %v111, %v113
    %119 = vadd.xlane.f32.xlu0 %v118
    %v120 = vpop.xlane.xlu0 %119
    %v121 = vadd.f32 %v115, %v117
    %122 = vadd.xlane.f32.xlu0 %v121
    %v123 = vpop.xlane.xlu0 %122
    %v124 = vsub.f32 %v94, %v102
    %v125 = vsub.f32 %v97, %v105
    %v126 = vmul.f32 %v124, 1.442695
    %v127 = vpow.pop %v126
    %v128 = vmul.f32 %v125, 1.442695
    %v129 = vpow.pop %v128
    %v130 = vsub.f32 %v120, %v127
    %v131 = vsub.f32 %v123, %v129
    %v132 = vsub.f32 %v98, %v102
    %v133 = vsub.f32 %v99, %v105
    %v134 = vmul.f32 %v132, 1.442695
    %v135 = vpow.pop %v134
    %v136 = vmul.f32 %v133, 1.442695
    %v137 = vpow.pop %v136
    %v138 = vadd.f32 %v130, %v135
    %v139 = vadd.f32 %v131, %v137
    %v140 = vlog2.pop %v138
    %v141 = vmul.f32 %v140, 0.6931472
    %v142 = vlog2.pop %v139
    %v143 = vmul.f32 %v142, 0.6931472
    %v144 = vadd.f32 %v102, %v141
    %v145 = vadd.f32 %v105, %v143
    %v146 = vsub.f32 %v144, %v98
    %v147 = vsub.f32 %v145, %v99
    %v148 = vsel %vm45, %v146, 0.0
    %v149 = vsel %vm46, %v147, 0.0
    %v150 = vld [vmem:[#allocation2] sm:$0x1]
    %vm151 = vcmask 7168
    %v152 = vsel %vm151, %v148, 0.0
    %v153 = vsel %vm151, %v149, 0.0
    %v154 = vadd.f32 %v152, %v153
    %155 = vadd.xlane.f32.xlu0 %v154
    %v156 = vpop.xlane.xlu0 %155
    %v157 = vrot.slane %v156, 4
    %v158 = vadd.f32 %v156, %v157
    %v159 = vrot.slane %v158, 2
    %v160 = vadd.f32 %v158, %v159
    %v161 = vrot.slane %v160, 1
    %v162 = vadd.f32 %v160, %v161
    %s163 = vtos %v162
    %v164 = vstv %s163
    %v165 = vadd.f32 %v150, %v164
    %vm166 = vcmask 0
    %167 = vst.msk [vmem:[#allocation2] sm:$0x1] %vm166, %v165
    // Predicated region
    $region18: #{tpu_custom_call.1} parent=1 // pred_check
      %p168 = pneg %p26
    $region19: #{tpu_custom_call.1} parent=1 // pred_check_branch
      %170 = sbr.rel (%p168) target = $region21
    $region20: #{tpu_custom_call.1} parent=1 // pred_region
      %v171 = vld [vmem:[#allocation2] sm:$0x1]
      %v172 = vmul.f32 %v171, 0.0625
      %173 = vst.msk [vmem:[#allocation6] sm:$0x1] %vm166, %v172
    $region21: #{tpu_custom_call.1} parent=1 // pred_fallthru
      _
    // Predicated region
    $region22: #{tpu_custom_call.1} parent=1 // pred_check
      _
    $region23: #{tpu_custom_call.1} parent=1 // pred_check_branch
      %175 = sbr.rel (0) target = $region25
    $region24: #{tpu_custom_call.1} parent=1 // pred_region
      %s177 = ssub.s32 16, 16
      %178 = vsyncadd [#allocation5], %s177
      %s180 = sshll.u32 [#allocation6], 4
      %s181 = int_to_ptr.vmem [resolvable:$true] %s180
      %183 = dma.vmem_to_hbm [thread:$0]  %s181, 16, %s2, [#allocation5]
    $region25: #{tpu_custom_call.1} parent=1 // pred_fallthru
      _
    // Predicated region
    $region26: #{tpu_custom_call.1} parent=1 // pred_check
      _
    $region27: #{tpu_custom_call.1} parent=1 // pred_check_branch
      %185 = sbr.rel (0) target = $region29
    $region28: #{tpu_custom_call.1} parent=1 // pred_region
      %186 = dma.done [#allocation5], 16
    $region29: #{tpu_custom_call.1} parent=1 // pred_fallthru
      _
    %187 = vsyncpa [#allocation4], 1
    %188 = vsyncpa [#allocation5], 1

</llo_original>
